<compile_context>
chip_gen: v6e
topology: v6e:2x2x1
jax: 0.10.0
libtpu: 0.0.40
codegen_flags: <defaults>
</compile_context>

<pallas_src>
import functools

import jax
import jax.numpy as jnp
from jax.experimental import pallas as pl
from jax.experimental.pallas import tpu as pltpu


# ----------------------------------------------------------------------------
# Kernel 1: HBM-bound streaming batch-sum of the (packed, lane-dense) input.
# Output block (8, n_in_p) is resident across the "arbitrary" step axis and
# holds sublane-group partial sums (pure full-vreg adds per tile).
# ----------------------------------------------------------------------------
def _stream_sum_kernel(x_ref, o_ref):
    j = pl.program_id(1)

    @pl.when(j == 0)
    def _init():
        o_ref[...] = jnp.zeros_like(o_ref)

    x = x_ref[...]                                      # (tb, n_in_p), tb % 8 == 0
    # Sublane-group partial sums: reduce over whole-vreg groups only (VALU adds),
    # no cross-sublane (XLU / masked) work inside the streaming loop.
    o_ref[...] += jnp.sum(x.reshape(-1, 8, x.shape[1]), axis=0)


# ----------------------------------------------------------------------------
# Kernel 2: one-shot affine head on the batch-mean row (both Linears + biases).
# All operands lane-dense (multiples of 128); dropout = identity at inference.
# ----------------------------------------------------------------------------
def _make_head_kernel(inv_b: float):
    def kernel(s_ref, w0_ref, b0_ref, w1_ref, b1_ref, o_ref):
        x_mean = s_ref[...] * inv_b                     # (1, n_in_f)
        h = jnp.dot(x_mean, w0_ref[...],
                    preferred_element_type=jnp.float32) + b0_ref[...]
        # Dropout: identity at inference (eval mode).
        y = jnp.dot(h, w1_ref[...],
                    preferred_element_type=jnp.float32) + b1_ref[...]
        o_ref[...] = y
    return kernel


def _round_up(x: int, m: int) -> int:
    return -(-x // m) * m


def _vmem_budget_bytes() -> int:
    """Generation-aware scoped-VMEM budget (leave headroom under physical)."""
    try:
        cap = int(pltpu.get_tpu_info().vmem_capacity_bytes)
    except Exception:
        cap = 64 * 1024 * 1024                          # conservative (v7x-sized)
    # ~70% of physical: ~44 MiB on v7x (64 MiB), ~90 MiB on v5e/v6e (128 MiB).
    return max(32 * 1024 * 1024, (cap * 7) // 10)


def mlp_regression_forward(x, w0_t, b0, w1_t, b1):
    """x: (B, n_inputs) f32. w*_t: (in, out) f32 (pre-transposed). b*: (1, out) f32.
    Returns (n_outputs,) f32, matching torch.mean(layer1(layer0(x)), dim=0)."""
    f32 = jnp.float32
    x = x.astype(f32)
    B, n_in = x.shape
    n_hid = w0_t.shape[1]
    n_out = w1_t.shape[1]

    vmem_limit = _vmem_budget_bytes()

    # ---- lane-dense packing / padding of the streamed input -----------------
    if n_in < 128 and 128 % n_in == 0:
        pack = 128 // n_in                              # pack rows into 128 lanes
        n_in_p = n_in * pack                            # == 128
        rows = -(-B // pack)
        b_pad = rows * pack
        if b_pad != B:                                  # zero rows: sum unchanged
            x = jnp.pad(x, ((0, b_pad - B), (0, 0)))
        x_packed = x.reshape(rows, n_in_p)
    else:
        pack = 1
        n_in_p = _round_up(n_in, 128)                   # zero cols: lane-dense
        if n_in_p != n_in:
            x = jnp.pad(x, ((0, 0), (0, n_in_p - n_in)))
        rows = B
        x_packed = x

    # ---- batch tiling: big tiles (8-16 MiB), 2 shards for megacore on v7x ----
    bytes_per_row = n_in_p * 4
    tile_budget = min(16 * 1024 * 1024, vmem_limit // 3)   # 2x buffered + headroom
    tb_max = max(8, (tile_budget // bytes_per_row) // 8 * 8)

    n_shards = 2 if rows > tb_max else 1
    rows_per_shard = -(-rows // n_shards)
    tb = min(tb_max, _round_up(rows_per_shard, 8))
    steps = -(-rows_per_shard // tb)
    total_rows = n_shards * steps * tb
    if total_rows != rows:
        x_packed = jnp.pad(x_packed, ((0, total_rows - rows), (0, 0)))

    cost_stream = pl.CostEstimate(
        flops=total_rows * n_in_p,
        transcendentals=0,
        bytes_accessed=(total_rows * n_in_p + n_shards * 8 * n_in_p) * 4,
    )

    partials = pl.pallas_call(
        _stream_sum_kernel,
        out_shape=jax.ShapeDtypeStruct((n_shards * 8, n_in_p), f32),
        grid=(n_shards, steps),
        in_specs=[
            pl.BlockSpec((tb, n_in_p), lambda s, j: (s * steps + j, 0)),
        ],
        out_specs=pl.BlockSpec((8, n_in_p), lambda s, j: (s, 0)),
        compiler_params=pltpu.CompilerParams(
            dimension_semantics=("parallel", "arbitrary"),
            vmem_limit_bytes=vmem_limit,
        ),
        cost_estimate=cost_stream,
    )(x_packed)

    # ---- tiny wrapper-side folds (O(128) floats): shard + sublane + pack ----
    s = jnp.sum(partials, axis=0)                       # (n_in_p,)
    if pack > 1:
        s = s.reshape(pack, n_in).sum(axis=0)           # fold packed row groups
    else:
        s = s[:n_in]                                    # strip lane padding

    # ---- one-shot affine head (weights touched exactly once, lane-dense) ----
    n_in_f = _round_up(n_in, 128)
    n_hid_p = _round_up(n_hid, 128)
    n_out_p = _round_up(n_out, 128)

    s_row = jnp.pad(s, (0, n_in_f - n_in)).reshape(1, n_in_f)
    w0_p = jnp.pad(w0_t.astype(f32), ((0, n_in_f - n_in), (0, n_hid_p - n_hid)))
    b0_p = jnp.pad(b0.astype(f32).reshape(1, n_hid), ((0, 0), (0, n_hid_p - n_hid)))
    w1_p = jnp.pad(w1_t.astype(f32), ((0, n_hid_p - n_hid), (0, n_out_p - n_out)))
    b1_p = jnp.pad(b1.astype(f32).reshape(1, n_out), ((0, 0), (0, n_out_p - n_out)))

    head = pl.pallas_call(
        _make_head_kernel(1.0 / B),
        out_shape=jax.ShapeDtypeStruct((1, n_out_p), f32),
        compiler_params=pltpu.CompilerParams(vmem_limit_bytes=vmem_limit),
    )
    out = head(s_row, w0_p, b0_p, w1_p, b1_p)

    return out[0, :n_out]


def init_params(key, n_inputs, n_hiddens, n_outputs):
    """Deterministic init mimicking PyTorch Linear default:
    U(-1/sqrt(fan_in), 1/sqrt(fan_in)) for weights and biases."""
    k0w, k0b, k1w, k1b = jax.random.split(key, 4)
    bound0 = 1.0 / jnp.sqrt(jnp.float32(n_inputs))
    bound1 = 1.0 / jnp.sqrt(jnp.float32(n_hiddens))
    # stored pre-transposed: (in, out)
    w0_t = jax.random.uniform(k0w, (n_inputs, n_hiddens), jnp.float32,
                              -bound0, bound0)
    b0 = jax.random.uniform(k0b, (1, n_hiddens), jnp.float32, -bound0, bound0)
    w1_t = jax.random.uniform(k1w, (n_hiddens, n_outputs), jnp.float32,
                              -bound1, bound1)
    # bias_init=None path -> default init for layer1 bias
    b1 = jax.random.uniform(k1b, (1, n_outputs), jnp.float32, -bound1, bound1)
    return w0_t, b0, w1_t, b1


if __name__ == "__main__":
    # Small shapes consistent with the module's forward: x is (batch, n_inputs)
    batch, n_inputs, n_hiddens, n_outputs = 8, 32, 32, 8

    key = jax.random.PRNGKey(0)
    kx, kp = jax.random.split(key)
    x = jax.random.normal(kx, (batch, n_inputs), jnp.float32)
    w0_t, b0, w1_t, b1 = init_params(kp, n_inputs, n_hiddens, n_outputs)

    out = mlp_regression_forward(x, w0_t, b0, w1_t, b1)
    out = jax.block_until_ready(out)

    # Pure-JAX reference check (dropout is identity at inference).
    ref = jnp.mean((x @ w0_t + b0) @ w1_t + b1, axis=0)
    assert out.shape == (n_outputs,)
    assert jnp.allclose(out, ref, atol=1e-5, rtol=1e-5)

    print("KERNEL_OK")
</pallas_src>

<mosaic_0001>
module attributes {stable_mosaic.version = 11 : i64} {
  func.func @_stream_sum_kernel(%arg0: i32, %arg1: i32, %arg2: memref<8x128xf32, #tpu.memory_space<vmem>>, %arg3: memref<8x128xf32, #tpu.memory_space<vmem>>) attributes {dimension_semantics = [#tpu.dimension_semantics<parallel>, #tpu.dimension_semantics<arbitrary>], iteration_bounds = array<i64: 1, 1>, scalar_prefetch = 0 : i64, scratch_operands = 0 : i64, tpu.core_type = #tpu.core_type<tc>, window_params = [{transform_indices = @transform_0, window_bounds = array<i64: 8, 128>}, {transform_indices = @transform_1, window_bounds = array<i64: 8, 128>}]} {
    %c0_i32 = arith.constant 0 : i32
    %0 = arith.cmpi eq, %arg1, %c0_i32 : i32
    %1 = arith.extui %0 : i1 to i32
    %c0_i32_0 = arith.constant 0 : i32
    %2 = arith.cmpi ne, %1, %c0_i32_0 : i32
    scf.if %2 {
      %cst_6 = arith.constant 0.000000e+00 : f32
      %9 = vector.broadcast %cst_6 : f32 to vector<8x128xf32>
      %c0_7 = arith.constant 0 : index
      %c0_8 = arith.constant 0 : index
      %10 = vector.load %arg3[%c0_7, %c0_8] : memref<8x128xf32, #tpu.memory_space<vmem>>, vector<8x128xf32>
      tpu.vector_store %arg3[%c0_7, %c0_8], %9 {strides = array<i32>} : memref<8x128xf32, #tpu.memory_space<vmem>>, vector<8x128xf32>,
    } else {
    }
    %c0 = arith.constant 0 : index
    %c0_1 = arith.constant 0 : index
    %3 = vector.load %arg2[%c0, %c0_1] : memref<8x128xf32, #tpu.memory_space<vmem>>, vector<8x128xf32>
    %c0_2 = arith.constant 0 : index
    %c0_3 = arith.constant 0 : index
    %4 = vector.load %arg3[%c0_2, %c0_3] : memref<8x128xf32, #tpu.memory_space<vmem>>, vector<8x128xf32>
    %5 = vector.shape_cast %3 : vector<8x128xf32> to vector<1x8x128xf32>
    %cst = arith.constant dense<0.000000e+00> : vector<8x128xf32>
    %6 = vector.multi_reduction <add>, %5, %cst [0] : vector<1x8x128xf32> to vector<8x128xf32>
    %7 = arith.addf %4, %6 : vector<8x128xf32>
    %c0_4 = arith.constant 0 : index
    %c0_5 = arith.constant 0 : index
    %8 = vector.load %arg3[%c0_4, %c0_5] : memref<8x128xf32, #tpu.memory_space<vmem>>, vector<8x128xf32>
    tpu.vector_store %arg3[%c0_4, %c0_5], %7 {strides = array<i32>} : memref<8x128xf32, #tpu.memory_space<vmem>>, vector<8x128xf32>,
    return
  }
  func.func @transform_0(%arg0: i32, %arg1: i32) -> (i32, i32) {
    %c1_i32 = arith.constant 1 : i32
    %0 = arith.muli %arg0, %c1_i32 : i32
    %1 = arith.addi %0, %arg1 : i32
    %c0_i32 = arith.constant 0 : i32
    %c0_i32_0 = arith.constant 0 : i32
    return %1, %c0_i32 : i32, i32
  }
  func.func @transform_1(%arg0: i32, %arg1: i32) -> (i32, i32) {
    %c0_i32 = arith.constant 0 : i32
    %c0_i32_0 = arith.constant 0 : i32
    return %arg0, %c0_i32 : i32, i32
  }
}

</mosaic_0001>

<llo_original>
// kernel: tpu_custom_call.1
$region0: #{tpu_custom_call.1}
  #allocation0 [shape = 'u32[]', space=smem, size = 0x4, offset = 0x4, fixed_abs, tag = 'smem constant byte address 0x4 - core index']
  #allocation1 [shape = 'u32[144,128]{1,0:T(1,128)}', space=vmem, size = 0x12000, scoped, tag = 'internal scratch']
  %s0 = inlined_call_operand.hbm [shape: f32[8,128], index: 0, kind: input, shape index: {}]
  %s1 = inlined_call_operand.hbm [shape: f32[8,128], index: 1, kind: output, shape index: {}]
  %s2 = sld [smem:[#allocation0]]
  $region22: #{tpu_custom_call.1} parent=0
    _
  %s4 = ssub.s32 1, %s2
  %s5 = scalar_select 0, %s4, %s2
  $region1: #{tpu_custom_call.1} parent=0
    #allocation2 [shape = 'u8[4096]{0}', space=vmem, size = 0x1000, scoped, tag = 'input window, operand 0, single buffered']
    #allocation3 [shape = 's32[1]{0}', space=sflag, size = 0x4, scoped, tag = 'scoped memory for tpu_custom_call.1']
    #allocation4 [shape = 's32[1]{0}', space=sflag, size = 0x4, scoped, tag = 'scoped memory for tpu_custom_call.1']
    #allocation5 [shape = 'u8[4096]{0}', space=vmem, size = 0x1000, scoped, tag = 'output window, operand 0, single buffered']
    %6 = vsyncpa [#allocation3], 0
    %7 = vsyncpa [#allocation4], 0
    // Predicated region
    $region2: #{tpu_custom_call.1} parent=1 // pred_check
      _
    $region3: #{tpu_custom_call.1} parent=1 // pred_check_branch
      %9 = sbr.rel (0) target = $region5
    $region4: #{tpu_custom_call.1} parent=1 // pred_region
      %s10 = sadd.s32 0, 0
      %s12 = ssub.s32 128, 128
      %13 = vsyncadd [#allocation3], %s12
      %s14 = smul.addr %s10, 128
      %s15 = scalar_lea.hbm %s0, %s14
      %s17 = sshll.u32 [#allocation2], 4
      %s18 = int_to_ptr.vmem [resolvable:$true] %s17
      %20 = dma.hbm_to_vmem [thread:$0]  %s15, 128, %s18, [#allocation3]
    $region5: #{tpu_custom_call.1} parent=1 // pred_fallthru
      _
    // Predicated region
    $region6: #{tpu_custom_call.1} parent=1 // pred_check
      _
    $region7: #{tpu_custom_call.1} parent=1 // pred_check_branch
      %22 = sbr.rel (0) target = $region9
    $region8: #{tpu_custom_call.1} parent=1 // pred_region
      %23 = dma.done [#allocation3], 128
    $region9: #{tpu_custom_call.1} parent=1 // pred_fallthru
      _
    %s24 = sadd.s32 0, 0
    %p25 = scmp.eq.s32.totalorder 0, 0
    // Predicated region
    $region10: #{tpu_custom_call.1} parent=1 // pred_check
      %p26 = pneg %p25
    $region11: #{tpu_custom_call.1} parent=1 // pred_check_branch
      %28 = sbr.rel (%p26) target = $region13
    $region12: #{tpu_custom_call.1} parent=1 // pred_region
      %29 = vst [vmem:[#allocation5] sm:$0xff] 0.0
    $region13: #{tpu_custom_call.1} parent=1 // pred_fallthru
      _
    %v30 = vld [vmem:[#allocation2] sm:$0xff]
    %v31 = vld [vmem:[#allocation5] sm:$0xff]
    %v32 = vadd.f32 %v30, 0.0
    %v33 = vadd.f32 %v31, %v32
    %34 = vst [vmem:[#allocation5] sm:$0xff] %v33
    // Predicated region
    $region14: #{tpu_custom_call.1} parent=1 // pred_check
      _
    $region15: #{tpu_custom_call.1} parent=1 // pred_check_branch
      %36 = sbr.rel (0) target = $region17
    $region16: #{tpu_custom_call.1} parent=1 // pred_region
      %s38 = ssub.s32 128, 128
      %39 = vsyncadd [#allocation4], %s38
      %s41 = sshll.u32 [#allocation5], 4
      %s42 = int_to_ptr.vmem [resolvable:$true] %s41
      %44 = dma.vmem_to_hbm [thread:$0]  %s42, 128, %s1, [#allocation4]
    $region17: #{tpu_custom_call.1} parent=1 // pred_fallthru
      _
    // Predicated region
    $region18: #{tpu_custom_call.1} parent=1 // pred_check
      _
    $region19: #{tpu_custom_call.1} parent=1 // pred_check_branch
      %46 = sbr.rel (0) target = $region21
    $region20: #{tpu_custom_call.1} parent=1 // pred_region
      %47 = dma.done [#allocation4], 128
    $region21: #{tpu_custom_call.1} parent=1 // pred_fallthru
      _
    %48 = vsyncpa [#allocation3], 1
    %49 = vsyncpa [#allocation4], 1

</llo_original>
